<compile_context>
chip_gen: v7x
topology: tpu7x:2x2x1
jax: 0.10.0
libtpu: 0.0.40
codegen_flags: <defaults>
</compile_context>

<pallas_src>
import jax
import jax.numpy as jnp
from jax.experimental import pallas as pl
from jax.experimental.pallas import tpu as pltpu


def autoencoder_kernel(xT_ref,
                       w1_ref, b1_ref,
                       w2_ref, b2_ref,
                       w3_ref, b3_ref,
                       w4_ref, b4_ref,
                       oT_ref):
    # Feature-major: columns are batch samples (lane axis), rows are features.
    xT = xT_ref[...]                                                  # [W, TM]
    # encoder
    h = jnp.dot(w1_ref[...], xT, preferred_element_type=jnp.float32) + b1_ref[...]
    h = jnp.maximum(h, 0.0)                                           # [5, TM]
    h = jnp.dot(w2_ref[...], h, preferred_element_type=jnp.float32) + b2_ref[...]
    h = jnp.maximum(h, 0.0)                                           # [2, TM]
    # decoder
    h = jnp.dot(w3_ref[...], h, preferred_element_type=jnp.float32) + b3_ref[...]
    h = jnp.maximum(h, 0.0)                                           # [5, TM]
    h = jnp.dot(w4_ref[...], h, preferred_element_type=jnp.float32) + b4_ref[...]
    oT_ref[...] = jnp.maximum(h, 0.0)                                 # [W, TM]


def autoencoder_forward(x, params, tile_b=1024):
    """x: [B, window_size] float32.

    params: PyTorch-layout weights w_i [out, in] and biases b_i [out, 1].
    Returns [B, window_size], identical semantics to the PyTorch module.
    """
    B, W = x.shape
    w1, b1 = params["w1"], params["b1"]   # [5, W], [5, 1]
    w2, b2 = params["w2"], params["b2"]   # [2, 5], [2, 1]
    w3, b3 = params["w3"], params["b3"]   # [5, 2], [5, 1]
    w4, b4 = params["w4"], params["b4"]   # [W, 5], [W, 1]

    # Transpose once in the wrapper so the batch dimension is lane-dense.
    xT = x.T                                                          # [W, B]

    if B > tile_b:
        TM = tile_b
        pad = (-B) % TM
        if pad:
            xT = jnp.pad(xT, ((0, 0), (0, pad)))
    else:
        # Small batch: single full-extent block (no (8,128) divisibility needed).
        TM = B
        pad = 0
    Bp = B + pad
    grid = (pl.cdiv(Bp, TM),)

    const = lambda shape: pl.BlockSpec(shape, lambda i: (0, 0))

    outT = pl.pallas_call(
        autoencoder_kernel,
        out_shape=jax.ShapeDtypeStruct((W, Bp), jnp.float32),
        grid=grid,
        in_specs=[
            pl.BlockSpec((W, TM), lambda i: (0, i)),   # x^T, tiled over batch
            const(w1.shape), const(b1.shape),
            const(w2.shape), const(b2.shape),
            const(w3.shape), const(b3.shape),
            const(w4.shape), const(b4.shape),
        ],
        out_specs=pl.BlockSpec((W, TM), lambda i: (0, i)),
        compiler_params=pltpu.CompilerParams(
            dimension_semantics=("parallel",)),
    )(xT, w1, b1, w2, b2, w3, b3, w4, b4)

    return outT[:, :B].T


def init_params(key, window_size):
    """Deterministic init mimicking nn.Linear default (uniform +-1/sqrt(fan_in)).
    Weights stored in PyTorch layout [out, in]; biases as [out, 1] columns."""
    dims = [(window_size, 5), (5, 2), (2, 5), (5, window_size)]
    params = {}
    for idx, (fan_in, fan_out) in enumerate(dims, start=1):
        key, kw, kb = jax.random.split(key, 3)
        bound = 1.0 / jnp.sqrt(float(fan_in))
        params[f"w{idx}"] = jax.random.uniform(
            kw, (fan_out, fan_in), jnp.float32, minval=-bound, maxval=bound)
        params[f"b{idx}"] = jax.random.uniform(
            kb, (fan_out, 1), jnp.float32, minval=-bound, maxval=bound)
    return params


def reference_forward(x, params):
    h = x
    for i in range(1, 5):
        w, b = params[f"w{i}"], params[f"b{i}"]      # [out, in], [out, 1]
        h = jnp.maximum(h @ w.T + b.T, 0.0)
    return h


if __name__ == "__main__":
    window_size = 16
    batch = 300  # with tile_b=128 this exercises padding + a 3-step parallel grid

    key = jax.random.PRNGKey(0)
    key, kx = jax.random.split(key)
    x = jax.random.normal(kx, (batch, window_size), dtype=jnp.float32)
    params = init_params(key, window_size)

    out = autoencoder_forward(x, params, tile_b=128)
    out = jax.block_until_ready(out)

    ref = reference_forward(x, params)
    assert out.shape == (batch, window_size)
    assert jnp.allclose(out, ref, atol=1e-5, rtol=1e-5), "mismatch vs JAX reference"

    print("KERNEL_OK")
</pallas_src>

<mosaic_0001>
module attributes {stable_mosaic.version = 11 : i64} {
  func.func @autoencoder_kernel(%arg0: i32, %arg1: memref<16x128xf32, #tpu.memory_space<vmem>>, %arg2: memref<5x16xf32, #tpu.memory_space<vmem>>, %arg3: memref<5x1xf32, #tpu.memory_space<vmem>>, %arg4: memref<2x5xf32, #tpu.memory_space<vmem>>, %arg5: memref<2x1xf32, #tpu.memory_space<vmem>>, %arg6: memref<5x2xf32, #tpu.memory_space<vmem>>, %arg7: memref<5x1xf32, #tpu.memory_space<vmem>>, %arg8: memref<16x5xf32, #tpu.memory_space<vmem>>, %arg9: memref<16x1xf32, #tpu.memory_space<vmem>>, %arg10: memref<16x128xf32, #tpu.memory_space<vmem>>) attributes {dimension_semantics = [#tpu.dimension_semantics<parallel>], iteration_bounds = array<i64: 3>, scalar_prefetch = 0 : i64, scratch_operands = 0 : i64, tpu.core_type = #tpu.core_type<tc>, window_params = [{transform_indices = @transform_0, window_bounds = array<i64: 16, 128>}, {pipeline_mode = #tpu.pipeline_mode<synchronous>, transform_indices = @transform_1, window_bounds = array<i64: 5, 16>}, {pipeline_mode = #tpu.pipeline_mode<synchronous>, transform_indices = @transform_2, window_bounds = array<i64: 5, 1>}, {pipeline_mode = #tpu.pipeline_mode<synchronous>, transform_indices = @transform_3, window_bounds = array<i64: 2, 5>}, {pipeline_mode = #tpu.pipeline_mode<synchronous>, transform_indices = @transform_4, window_bounds = array<i64: 2, 1>}, {pipeline_mode = #tpu.pipeline_mode<synchronous>, transform_indices = @transform_5, window_bounds = array<i64: 5, 2>}, {pipeline_mode = #tpu.pipeline_mode<synchronous>, transform_indices = @transform_6, window_bounds = array<i64: 5, 1>}, {pipeline_mode = #tpu.pipeline_mode<synchronous>, transform_indices = @transform_7, window_bounds = array<i64: 16, 5>}, {pipeline_mode = #tpu.pipeline_mode<synchronous>, transform_indices = @transform_8, window_bounds = array<i64: 16, 1>}, {transform_indices = @transform_9, window_bounds = array<i64: 16, 128>}]} {
    %c0 = arith.constant 0 : index
    %c0_0 = arith.constant 0 : index
    %0 = vector.load %arg1[%c0, %c0_0] : memref<16x128xf32, #tpu.memory_space<vmem>>, vector<16x128xf32>
    %c0_1 = arith.constant 0 : index
    %c0_2 = arith.constant 0 : index
    %1 = vector.load %arg2[%c0_1, %c0_2] : memref<5x16xf32, #tpu.memory_space<vmem>>, vector<5x16xf32>
    %cst = arith.constant dense<0.000000e+00> : vector<5x128xf32>
    %2 = tpu.matmul %1, %0, %cst {dimension_numbers = #tpu.dot_dimension_numbers<[1], [0], [0], [1], [0, 0, 1, 1], [], []>} : vector<5x16xf32>, vector<16x128xf32>, vector<5x128xf32> -> vector<5x128xf32>
    %c0_3 = arith.constant 0 : index
    %c0_4 = arith.constant 0 : index
    %3 = vector.load %arg3[%c0_3, %c0_4] : memref<5x1xf32, #tpu.memory_space<vmem>>, vector<5x1xf32>
    %4 = vector.broadcast %3 : vector<5x1xf32> to vector<5x128xf32>
    %5 = arith.addf %2, %4 : vector<5x128xf32>
    %cst_5 = arith.constant 0.000000e+00 : f32
    %6 = vector.broadcast %cst_5 : f32 to vector<5x128xf32>
    %7 = arith.maximumf %5, %6 : vector<5x128xf32>
    %c0_6 = arith.constant 0 : index
    %c0_7 = arith.constant 0 : index
    %8 = vector.load %arg4[%c0_6, %c0_7] : memref<2x5xf32, #tpu.memory_space<vmem>>, vector<2x5xf32>
    %cst_8 = arith.constant dense<0.000000e+00> : vector<2x128xf32>
    %9 = tpu.matmul %8, %7, %cst_8 {dimension_numbers = #tpu.dot_dimension_numbers<[1], [0], [0], [1], [0, 0, 1, 1], [], []>} : vector<2x5xf32>, vector<5x128xf32>, vector<2x128xf32> -> vector<2x128xf32>
    %c0_9 = arith.constant 0 : index
    %c0_10 = arith.constant 0 : index
    %10 = vector.load %arg5[%c0_9, %c0_10] : memref<2x1xf32, #tpu.memory_space<vmem>>, vector<2x1xf32>
    %11 = vector.broadcast %10 : vector<2x1xf32> to vector<2x128xf32>
    %12 = arith.addf %9, %11 : vector<2x128xf32>
    %cst_11 = arith.constant 0.000000e+00 : f32
    %13 = vector.broadcast %cst_11 : f32 to vector<2x128xf32>
    %14 = arith.maximumf %12, %13 : vector<2x128xf32>
    %c0_12 = arith.constant 0 : index
    %c0_13 = arith.constant 0 : index
    %15 = vector.load %arg6[%c0_12, %c0_13] : memref<5x2xf32, #tpu.memory_space<vmem>>, vector<5x2xf32>
    %cst_14 = arith.constant dense<0.000000e+00> : vector<5x128xf32>
    %16 = tpu.matmul %15, %14, %cst_14 {dimension_numbers = #tpu.dot_dimension_numbers<[1], [0], [0], [1], [0, 0, 1, 1], [], []>} : vector<5x2xf32>, vector<2x128xf32>, vector<5x128xf32> -> vector<5x128xf32>
    %c0_15 = arith.constant 0 : index
    %c0_16 = arith.constant 0 : index
    %17 = vector.load %arg7[%c0_15, %c0_16] : memref<5x1xf32, #tpu.memory_space<vmem>>, vector<5x1xf32>
    %18 = vector.broadcast %17 : vector<5x1xf32> to vector<5x128xf32>
    %19 = arith.addf %16, %18 : vector<5x128xf32>
    %cst_17 = arith.constant 0.000000e+00 : f32
    %20 = vector.broadcast %cst_17 : f32 to vector<5x128xf32>
    %21 = arith.maximumf %19, %20 : vector<5x128xf32>
    %c0_18 = arith.constant 0 : index
    %c0_19 = arith.constant 0 : index
    %22 = vector.load %arg8[%c0_18, %c0_19] : memref<16x5xf32, #tpu.memory_space<vmem>>, vector<16x5xf32>
    %cst_20 = arith.constant dense<0.000000e+00> : vector<16x128xf32>
    %23 = tpu.matmul %22, %21, %cst_20 {dimension_numbers = #tpu.dot_dimension_numbers<[1], [0], [0], [1], [0, 0, 1, 1], [], []>} : vector<16x5xf32>, vector<5x128xf32>, vector<16x128xf32> -> vector<16x128xf32>
    %c0_21 = arith.constant 0 : index
    %c0_22 = arith.constant 0 : index
    %24 = vector.load %arg9[%c0_21, %c0_22] : memref<16x1xf32, #tpu.memory_space<vmem>>, vector<16x1xf32>
    %25 = vector.broadcast %24 : vector<16x1xf32> to vector<16x128xf32>
    %26 = arith.addf %23, %25 : vector<16x128xf32>
    %cst_23 = arith.constant 0.000000e+00 : f32
    %27 = vector.broadcast %cst_23 : f32 to vector<16x128xf32>
    %28 = arith.maximumf %26, %27 : vector<16x128xf32>
    %c0_24 = arith.constant 0 : index
    %c0_25 = arith.constant 0 : index
    %29 = vector.load %arg10[%c0_24, %c0_25] : memref<16x128xf32, #tpu.memory_space<vmem>>, vector<16x128xf32>
    tpu.vector_store %arg10[%c0_24, %c0_25], %28 {strides = array<i32>} : memref<16x128xf32, #tpu.memory_space<vmem>>, vector<16x128xf32>,
    return
  }
  func.func @transform_0(%arg0: i32) -> (i32, i32) {
    %c0_i32 = arith.constant 0 : i32
    %c0_i32_0 = arith.constant 0 : i32
    return %c0_i32, %arg0 : i32, i32
  }
  func.func @transform_1(%arg0: i32) -> (i32, i32) {
    %c0_i32 = arith.constant 0 : i32
    %c0_i32_0 = arith.constant 0 : i32
    %c0_i32_1 = arith.constant 0 : i32
    return %c0_i32, %c0_i32_0 : i32, i32
  }
  func.func @transform_2(%arg0: i32) -> (i32, i32) {
    %c0_i32 = arith.constant 0 : i32
    %c0_i32_0 = arith.constant 0 : i32
    %c0_i32_1 = arith.constant 0 : i32
    return %c0_i32, %c0_i32_0 : i32, i32
  }
  func.func @transform_3(%arg0: i32) -> (i32, i32) {
    %c0_i32 = arith.constant 0 : i32
    %c0_i32_0 = arith.constant 0 : i32
    %c0_i32_1 = arith.constant 0 : i32
    return %c0_i32, %c0_i32_0 : i32, i32
  }
  func.func @transform_4(%arg0: i32) -> (i32, i32) {
    %c0_i32 = arith.constant 0 : i32
    %c0_i32_0 = arith.constant 0 : i32
    %c0_i32_1 = arith.constant 0 : i32
    return %c0_i32, %c0_i32_0 : i32, i32
  }
  func.func @transform_5(%arg0: i32) -> (i32, i32) {
    %c0_i32 = arith.constant 0 : i32
    %c0_i32_0 = arith.constant 0 : i32
    %c0_i32_1 = arith.constant 0 : i32
    return %c0_i32, %c0_i32_0 : i32, i32
  }
  func.func @transform_6(%arg0: i32) -> (i32, i32) {
    %c0_i32 = arith.constant 0 : i32
    %c0_i32_0 = arith.constant 0 : i32
    %c0_i32_1 = arith.constant 0 : i32
    return %c0_i32, %c0_i32_0 : i32, i32
  }
  func.func @transform_7(%arg0: i32) -> (i32, i32) {
    %c0_i32 = arith.constant 0 : i32
    %c0_i32_0 = arith.constant 0 : i32
    %c0_i32_1 = arith.constant 0 : i32
    return %c0_i32, %c0_i32_0 : i32, i32
  }
  func.func @transform_8(%arg0: i32) -> (i32, i32) {
    %c0_i32 = arith.constant 0 : i32
    %c0_i32_0 = arith.constant 0 : i32
    %c0_i32_1 = arith.constant 0 : i32
    return %c0_i32, %c0_i32_0 : i32, i32
  }
  func.func @transform_9(%arg0: i32) -> (i32, i32) {
    %c0_i32 = arith.constant 0 : i32
    %c0_i32_0 = arith.constant 0 : i32
    return %c0_i32, %arg0 : i32, i32
  }
}

</mosaic_0001>

<llo_original>
// kernel: tpu_custom_call.1
$region0: #{tpu_custom_call.1}
  #allocation0 [shape = 'u32[]', space=smem, size = 0x4, offset = 0x4, fixed_abs, tag = 'smem constant byte address 0x4 - core index']
  #allocation1 [shape = 'u32[144,128]{1,0:T(1,128)}', space=vmem, size = 0x12000, scoped, tag = 'internal scratch']
  %s0 = inlined_call_operand.vmem [shape: f32[16,384], index: 0, kind: input, shape index: {}]
  %s1 = inlined_call_operand.vmem [shape: f32[5,16], index: 1, kind: input, shape index: {}]
  %s2 = inlined_call_operand.vmem [shape: f32[5,1], index: 2, kind: input, shape index: {}]
  %s3 = inlined_call_operand.vmem [shape: f32[2,5], index: 3, kind: input, shape index: {}]
  %s4 = inlined_call_operand.vmem [shape: f32[2,1], index: 4, kind: input, shape index: {}]
  %s5 = inlined_call_operand.vmem [shape: f32[5,2], index: 5, kind: input, shape index: {}]
  %s6 = inlined_call_operand.vmem [shape: f32[5,1], index: 6, kind: input, shape index: {}]
  %s7 = inlined_call_operand.vmem [shape: f32[16,5], index: 7, kind: input, shape index: {}]
  %s8 = inlined_call_operand.vmem [shape: f32[16,1], index: 8, kind: input, shape index: {}]
  %s9 = inlined_call_operand.hbm [shape: f32[16,384], index: 9, kind: output, shape index: {}]
  %s10 = sld [smem:[#allocation0]]
  $region107: #{tpu_custom_call.1} parent=0
    _
  %s12 = ssub.s32 1, %s10
  %s13 = scalar_select 0, %s12, %s10
  $region1: #{tpu_custom_call.1} parent=0
    #allocation2 [shape = 'u8[16384]{0}', space=vmem, size = 0x4000, scoped, tag = 'input window, operand 0']
    #allocation3 [shape = 'u8[16384]{0}', space=vmem, size = 0x4000, scoped, tag = 'output window, operand 0']
    #allocation4 [shape = 's32[2]{0}', space=sflag, size = 0x8, scoped, tag = 'scoped memory for tpu_custom_call.1']
    %14 = vsyncpa [#allocation4], 0
    %s15 = scalar_lea.sflag [#allocation4], 1
    %16 = vsyncpa %s15, 0
    loop: start=0, step=1, limit=5
    $region2: #{tpu_custom_call.1} parent=1 // loop_pre_header
      _
    $region3: #{tpu_custom_call.1} parent=1 // loop_header
      %s18 = sphi 0, %s22
      %p19 = scmp.ge.s32.totalorder %s18, 5
      %s28 = sphi 0, %s30
      %s31 = sphi 0, %s28
      %s32 = sphi 0, %s31
      %s48 = sphi 0, %s32
      %s52 = sphi 0, %s52
      %s54 = sphi 0, %s52
      %s55 = sphi 0, %s54
      %s69 = sphi 0, %s55
      %s73 = sphi 0, %s73
      %s75 = sphi 0, %s73
      %s76 = sphi 0, %s75
      %s90 = sphi 0, %s76
      %s94 = sphi 0, %s94
      %s96 = sphi 0, %s94
      %s97 = sphi 0, %s96
      %s111 = sphi 0, %s97
      %s115 = sphi 0, %s115
      %s117 = sphi 0, %s115
      %s118 = sphi 0, %s117
      %s132 = sphi 0, %s118
      %s136 = sphi 0, %s136
      %s138 = sphi 0, %s136
      %s139 = sphi 0, %s138
      %s153 = sphi 0, %s139
      %s157 = sphi 0, %s157
      %s159 = sphi 0, %s157
      %s160 = sphi 0, %s159
      %s174 = sphi 0, %s160
      %s178 = sphi 0, %s178
      %s180 = sphi 0, %s178
      %s181 = sphi 0, %s180
      %s195 = sphi 0, %s181
      %s199 = sphi 0, %s199
      %s201 = sphi 0, %s199
      %s202 = sphi 0, %s201
      %s216 = sphi 0, %s202
      %s222 = sphi 0, %s224
      %s225 = sphi 0, %s222
      %s226 = sphi 0, %s225
      %s242 = sphi 0, %s226
    $region4: #{tpu_custom_call.1} parent=1 // loop_header_branch
      %21 = sbr.rel (%p19) target = $region8
    $region5: #{tpu_custom_call.1} parent=1 // loop_body
      %s23 = ssub.s32 %s18, 1
      %s24 = ssub.s32 %s18, 2
      %s25 = sadd.s32 %s18, 1
      %s26 = ssub.s32 %s18, %s25
      %p27 = scmp.eq.s32.totalorder %s26, 0
      %s29 = sadd.s32 %s28, 1
      %s30 = scalar_select %p27, %s28, %s29
      %p33 = pneg %p27
      %p34 = scmp.eq.s32.totalorder %s18, 2
      %p35 = por %p33, %p34
      %p36 = scmp.ne.s32.totalorder %s28, %s31
      %p37 = scmp.eq.s32.totalorder %s18, 0
      %p38 = por %p36, %p37
      %p39 = scmp.ne.s32.totalorder %s28, %s31
      %p40 = scmp.eq.s32.totalorder %s23, 2
      %p41 = por %p39, %p40
      %p42 = scmp.ne.s32.totalorder %s31, %s32
      %p43 = scmp.eq.s32.totalorder %s23, 0
      %p44 = por %p42, %p43
      %p45 = scmp.ne.s32.totalorder %s31, %s32
      %p46 = scmp.eq.s32.totalorder %s24, 2
      %p47 = por %p45, %p46
      %p49 = scmp.ne.s32.totalorder %s32, %s48
      %p50 = scmp.eq.s32.totalorder %s24, 0
      %p51 = por %p49, %p50
      %s53 = sadd.s32 %s52, 1
      %p56 = scmp.eq.s32.totalorder %s18, 2
      %p57 = scmp.ne.s32.totalorder %s52, %s54
      %p58 = scmp.eq.s32.totalorder %s18, 0
      %p59 = por %p57, %p58
      %p60 = scmp.ne.s32.totalorder %s52, %s54
      %p61 = scmp.eq.s32.totalorder %s23, 2
      %p62 = por %p60, %p61
      %p63 = scmp.ne.s32.totalorder %s54, %s55
      %p64 = scmp.eq.s32.totalorder %s23, 0
      %p65 = por %p63, %p64
      %p66 = scmp.ne.s32.totalorder %s54, %s55
      %p67 = scmp.eq.s32.totalorder %s24, 2
      %p68 = por %p66, %p67
      %p70 = scmp.ne.s32.totalorder %s55, %s69
      %p71 = scmp.eq.s32.totalorder %s24, 0
      %p72 = por %p70, %p71
      %s74 = sadd.s32 %s73, 1
      %p77 = scmp.eq.s32.totalorder %s18, 2
      %p78 = scmp.ne.s32.totalorder %s73, %s75
      %p79 = scmp.eq.s32.totalorder %s18, 0
      %p80 = por %p78, %p79
      %p81 = scmp.ne.s32.totalorder %s73, %s75
      %p82 = scmp.eq.s32.totalorder %s23, 2
      %p83 = por %p81, %p82
      %p84 = scmp.ne.s32.totalorder %s75, %s76
      %p85 = scmp.eq.s32.totalorder %s23, 0
      %p86 = por %p84, %p85
      %p87 = scmp.ne.s32.totalorder %s75, %s76
      %p88 = scmp.eq.s32.totalorder %s24, 2
      %p89 = por %p87, %p88
      %p91 = scmp.ne.s32.totalorder %s76, %s90
      %p92 = scmp.eq.s32.totalorder %s24, 0
      %p93 = por %p91, %p92
      %s95 = sadd.s32 %s94, 1
      %p98 = scmp.eq.s32.totalorder %s18, 2
      %p99 = scmp.ne.s32.totalorder %s94, %s96
      %p100 = scmp.eq.s32.totalorder %s18, 0
      %p101 = por %p99, %p100
      %p102 = scmp.ne.s32.totalorder %s94, %s96
      %p103 = scmp.eq.s32.totalorder %s23, 2
      %p104 = por %p102, %p103
      %p105 = scmp.ne.s32.totalorder %s96, %s97
      %p106 = scmp.eq.s32.totalorder %s23, 0
      %p107 = por %p105, %p106
      %p108 = scmp.ne.s32.totalorder %s96, %s97
      %p109 = scmp.eq.s32.totalorder %s24, 2
      %p110 = por %p108, %p109
      %p112 = scmp.ne.s32.totalorder %s97, %s111
      %p113 = scmp.eq.s32.totalorder %s24, 0
      %p114 = por %p112, %p113
      %s116 = sadd.s32 %s115, 1
      %p119 = scmp.eq.s32.totalorder %s18, 2
      %p120 = scmp.ne.s32.totalorder %s115, %s117
      %p121 = scmp.eq.s32.totalorder %s18, 0
      %p122 = por %p120, %p121
      %p123 = scmp.ne.s32.totalorder %s115, %s117
      %p124 = scmp.eq.s32.totalorder %s23, 2
      %p125 = por %p123, %p124
      %p126 = scmp.ne.s32.totalorder %s117, %s118
      %p127 = scmp.eq.s32.totalorder %s23, 0
      %p128 = por %p126, %p127
      %p129 = scmp.ne.s32.totalorder %s117, %s118
      %p130 = scmp.eq.s32.totalorder %s24, 2
      %p131 = por %p129, %p130
      %p133 = scmp.ne.s32.totalorder %s118, %s132
      %p134 = scmp.eq.s32.totalorder %s24, 0
      %p135 = por %p133, %p134
      %s137 = sadd.s32 %s136, 1
      %p140 = scmp.eq.s32.totalorder %s18, 2
      %p141 = scmp.ne.s32.totalorder %s136, %s138
      %p142 = scmp.eq.s32.totalorder %s18, 0
      %p143 = por %p141, %p142
      %p144 = scmp.ne.s32.totalorder %s136, %s138
      %p145 = scmp.eq.s32.totalorder %s23, 2
      %p146 = por %p144, %p145
      %p147 = scmp.ne.s32.totalorder %s138, %s139
      %p148 = scmp.eq.s32.totalorder %s23, 0
      %p149 = por %p147, %p148
      %p150 = scmp.ne.s32.totalorder %s138, %s139
      %p151 = scmp.eq.s32.totalorder %s24, 2
      %p152 = por %p150, %p151
      %p154 = scmp.ne.s32.totalorder %s139, %s153
      %p155 = scmp.eq.s32.totalorder %s24, 0
      %p156 = por %p154, %p155
      %s158 = sadd.s32 %s157, 1
      %p161 = scmp.eq.s32.totalorder %s18, 2
      %p162 = scmp.ne.s32.totalorder %s157, %s159
      %p163 = scmp.eq.s32.totalorder %s18, 0
      %p164 = por %p162, %p163
      %p165 = scmp.ne.s32.totalorder %s157, %s159
      %p166 = scmp.eq.s32.totalorder %s23, 2
      %p167 = por %p165, %p166
      %p168 = scmp.ne.s32.totalorder %s159, %s160
      %p169 = scmp.eq.s32.totalorder %s23, 0
      %p170 = por %p168, %p169
      %p171 = scmp.ne.s32.totalorder %s159, %s160
      %p172 = scmp.eq.s32.totalorder %s24, 2
      %p173 = por %p171, %p172
      %p175 = scmp.ne.s32.totalorder %s160, %s174
      %p176 = scmp.eq.s32.totalorder %s24, 0
      %p177 = por %p175, %p176
      %s179 = sadd.s32 %s178, 1
      %p182 = scmp.eq.s32.totalorder %s18, 2
      %p183 = scmp.ne.s32.totalorder %s178, %s180
      %p184 = scmp.eq.s32.totalorder %s18, 0
      %p185 = por %p183, %p184
      %p186 = scmp.ne.s32.totalorder %s178, %s180
      %p187 = scmp.eq.s32.totalorder %s23, 2
      %p188 = por %p186, %p187
      %p189 = scmp.ne.s32.totalorder %s180, %s181
      %p190 = scmp.eq.s32.totalorder %s23, 0
      %p191 = por %p189, %p190
      %p192 = scmp.ne.s32.totalorder %s180, %s181
      %p193 = scmp.eq.s32.totalorder %s24, 2
      %p194 = por %p192, %p193
      %p196 = scmp.ne.s32.totalorder %s181, %s195
      %p197 = scmp.eq.s32.totalorder %s24, 0
      %p198 = por %p196, %p197
      %s200 = sadd.s32 %s199, 1
      %p203 = scmp.eq.s32.totalorder %s18, 2
      %p204 = scmp.ne.s32.totalorder %s199, %s201
      %p205 = scmp.eq.s32.totalorder %s18, 0
      %p206 = por %p204, %p205
      %p207 = scmp.ne.s32.totalorder %s199, %s201
      %p208 = scmp.eq.s32.totalorder %s23, 2
      %p209 = por %p207, %p208
      %p210 = scmp.ne.s32.totalorder %s201, %s202
      %p211 = scmp.eq.s32.totalorder %s23, 0
      %p212 = por %p210, %p211
      %p213 = scmp.ne.s32.totalorder %s201, %s202
      %p214 = scmp.eq.s32.totalorder %s24, 2
      %p215 = por %p213, %p214
      %p217 = scmp.ne.s32.totalorder %s202, %s216
      %p218 = scmp.eq.s32.totalorder %s24, 0
      %p219 = por %p217, %p218
      %s220 = ssub.s32 %s18, %s25
      %p221 = scmp.eq.s32.totalorder %s220, 0
      %s223 = sadd.s32 %s222, 1
      %s224 = scalar_select %p221, %s222, %s223
      %p227 = pneg %p221
      %p228 = scmp.eq.s32.totalorder %s18, 2
      %p229 = por %p227, %p228
      %p230 = scmp.ne.s32.totalorder %s222, %s225
      %p231 = scmp.eq.s32.totalorder %s18, 0
      %p232 = por %p230, %p231
      %p233 = scmp.ne.s32.totalorder %s222, %s225
      %p234 = scmp.eq.s32.totalorder %s23, 2
      %p235 = por %p233, %p234
      %p236 = scmp.ne.s32.totalorder %s225, %s226
      %p237 = scmp.eq.s32.totalorder %s23, 0
      %p238 = por %p236, %p237
      %p239 = scmp.ne.s32.totalorder %s225, %s226
      %p240 = scmp.eq.s32.totalorder %s24, 2
      %p241 = por %p239, %p240
      %p243 = scmp.ne.s32.totalorder %s226, %s242
      %p244 = scmp.eq.s32.totalorder %s24, 0
      %p245 = por %p243, %p244
      %p246 = scmp.le.s32.totalorder 1, %s18
      %p247 = scmp.lt.s32.totalorder %s18, 4
      %p248 = pnand %p246, %p247
      %p249 = pneg %p248
      // Predicated region
      $region9: #{tpu_custom_call.1} parent=5 // pred_check
        _
      $region10: #{tpu_custom_call.1} parent=5 // pred_check_branch
        %251 = sbr.rel (%p248) target = $region12
      $region11: #{tpu_custom_call.1} parent=5 // pred_region
        %s252 = ssub.s32 %s18, 1
        // Predicated region
        $region13: #{tpu_custom_call.1} parent=11 // pred_check
          %p253 = pneg %p65
        $region14: #{tpu_custom_call.1} parent=11 // pred_check_branch
          %255 = sbr.rel (%p253) target = $region16
        $region15: #{tpu_custom_call.1} parent=11 // pred_region
          _
        $region16: #{tpu_custom_call.1} parent=11 // pred_fallthru
          _
        // Predicated region
        $region17: #{tpu_custom_call.1} parent=11 // pred_check
          %p256 = pneg %p86
        $region18: #{tpu_custom_call.1} parent=11 // pred_check_branch
          %258 = sbr.rel (%p256) target = $region20
        $region19: #{tpu_custom_call.1} parent=11 // pred_region
          _
        $region20: #{tpu_custom_call.1} parent=11 // pred_fallthru
          _
        // Predicated region
        $region21: #{tpu_custom_call.1} parent=11 // pred_check
          %p259 = pneg %p107
        $region22: #{tpu_custom_call.1} parent=11 // pred_check_branch
          %261 = sbr.rel (%p259) target = $region24
        $region23: #{tpu_custom_call.1} parent=11 // pred_region
          _
        $region24: #{tpu_custom_call.1} parent=11 // pred_fallthru
          _
        // Predicated region
        $region25: #{tpu_custom_call.1} parent=11 // pred_check
          %p262 = pneg %p128
        $region26: #{tpu_custom_call.1} parent=11 // pred_check_branch
          %264 = sbr.rel (%p262) target = $region28
        $region27: #{tpu_custom_call.1} parent=11 // pred_region
          _
        $region28: #{tpu_custom_call.1} parent=11 // pred_fallthru
          _
        // Predicated region
        $region29: #{tpu_custom_call.1} parent=11 // pred_check
          %p265 = pneg %p149
        $region30: #{tpu_custom_call.1} parent=11 // pred_check_branch
          %267 = sbr.rel (%p265) target = $region32
        $region31: #{tpu_custom_call.1} parent=11 // pred_region
          _
        $region32: #{tpu_custom_call.1} parent=11 // pred_fallthru
          _
        // Predicated region
        $region33: #{tpu_custom_call.1} parent=11 // pred_check
          %p268 = pneg %p170
        $region34: #{tpu_custom_call.1} parent=11 // pred_check_branch
          %270 = sbr.rel (%p268) target = $region36
        $region35: #{tpu_custom_call.1} parent=11 // pred_region
          _
        $region36: #{tpu_custom_call.1} parent=11 // pred_fallthru
          _
        // Predicated region
        $region37: #{tpu_custom_call.1} parent=11 // pred_check
          %p271 = pneg %p191
        $region38: #{tpu_custom_call.1} parent=11 // pred_check_branch
          %273 = sbr.rel (%p271) target = $region40
        $region39: #{tpu_custom_call.1} parent=11 // pred_region
          _
        $region40: #{tpu_custom_call.1} parent=11 // pred_fallthru
          _
        // Predicated region
        $region41: #{tpu_custom_call.1} parent=11 // pred_check
          %p274 = pneg %p212
        $region42: #{tpu_custom_call.1} parent=11 // pred_check_branch
          %276 = sbr.rel (%p274) target = $region44
        $region43: #{tpu_custom_call.1} parent=11 // pred_region
          _
        $region44: #{tpu_custom_call.1} parent=11 // pred_fallthru
          _
      $region12: #{tpu_custom_call.1} parent=5 // pred_fallthru
        _
      %p277 = scmp.lt.s32.totalorder %s18, 3
      // Predicated region
      $region45: #{tpu_custom_call.1} parent=5 // pred_check
        %p278 = pneg %p277
      $region46: #{tpu_custom_call.1} parent=5 // pred_check_branch
        %280 = sbr.rel (%p278) target = $region48
      $region47: #{tpu_custom_call.1} parent=5 // pred_region
        // Predicated region
        $region49: #{tpu_custom_call.1} parent=47 // pred_check
          %p281 = pneg %p38
        $region50: #{tpu_custom_call.1} parent=47 // pred_check_branch
          %283 = sbr.rel (%p281) target = $region52
        $region51: #{tpu_custom_call.1} parent=47 // pred_region
          %s284 = sand.u32 %s28, 1
          %s285 = sand.u32 %s28, 1
          %s286 = smul.addr %s285, 16
          %s287 = scalar_lea.vmem [#allocation2], %s286
          %s288 = smul.addr %s18, 8
          %s289 = scalar_lea.vmem %s0, %s288
          // Predicated region
          $region53: #{tpu_custom_call.1} parent=51 // pred_check
            _
          $region54: #{tpu_custom_call.1} parent=51 // pred_check_branch
            %291 = sbr.rel (0) target = $region56
          $region55: #{tpu_custom_call.1} parent=51 // pred_region
            // Predicated region
            $region57: #{tpu_custom_call.1} parent=55 // pred_check
              _
            $region58: #{tpu_custom_call.1} parent=55 // pred_check_branch
              %293 = sbr.rel (0) target = $region60
            $region59: #{tpu_custom_call.1} parent=55 // pred_region
              // Predicated region
              $region72: #{tpu_custom_call.1} parent=59 // pred_check
                _
              $region73: #{tpu_custom_call.1} parent=59 // pred_check_branch
                %310 = sbr.rel (0) target = $region75
              $region74: #{tpu_custom_call.1} parent=59 // pred_region
                loop: start=0, step=1, limit=1
                $region76: #{tpu_custom_call.1} parent=74 // loop_pre_header
                  _
                $region77: #{tpu_custom_call.1} parent=74 // loop_header
                  %s312 = sphi 0, %s316
                  %p313 = scmp.ge.s32.totalorder %s312, 1
                  %s317 = sphi %s289, %s289
                  %s318 = sphi %s287, %s287
                $region78: #{tpu_custom_call.1} parent=74 // loop_header_branch
                  %315 = sbr.rel (%p313) target = $region82
                $region79: #{tpu_custom_call.1} parent=74 // loop_body
                  %v319 = vld [vmem:[%s317] sm:$0xff]
                  %320 = vst [vmem:[%s318] sm:$0xff] %v319
                  %v321 = vld [vmem:[%s317 + $0x18] sm:$0xff]
                  %322 = vst [vmem:[%s318 + $0x8] sm:$0xff] %v321
                $region80: #{tpu_custom_call.1} parent=74 // loop_footer
                  %s316 = sadd.s32 1, %s312
                $region81: #{tpu_custom_call.1} parent=74 // loop_footer_branch
                  %311 = sbr.rel target = $region77
                $region82: #{tpu_custom_call.1} parent=74 // loop_exit
                  _
              $region75: #{tpu_custom_call.1} parent=59 // pred_fallthru
                _
              // Predicated region
              $region83: #{tpu_custom_call.1} parent=59 // pred_check
                _
              $region84: #{tpu_custom_call.1} parent=59 // pred_check_branch
                %324 = sbr.rel target = $region86
              $region85: #{tpu_custom_call.1} parent=59 // pred_region
                _
              $region86: #{tpu_custom_call.1} parent=59 // pred_fallthru
                _
            $region60: #{tpu_custom_call.1} parent=55 // pred_fallthru
              _
            // Predicated region
            $region61: #{tpu_custom_call.1} parent=55 // pred_check
              _
            $region62: #{tpu_custom_call.1} parent=55 // pred_check_branch
              %295 = sbr.rel target = $region64
            $region63: #{tpu_custom_call.1} parent=55 // pred_region
              loop: start=0, step=1, limit=1
              $region65: #{tpu_custom_call.1} parent=63 // loop_pre_header
                _
              $region66: #{tpu_custom_call.1} parent=63 // loop_header
                %s298 = sphi 0, %s302
                %p299 = scmp.ge.s32.totalorder %s298, 1
                %s303 = sphi %s289, %s289
                %s304 = sphi %s287, %s287
              $region67: #{tpu_custom_call.1} parent=63 // loop_header_branch
                %301 = sbr.rel (%p299) target = $region71
              $region68: #{tpu_custom_call.1} parent=63 // loop_body
                %v305 = vld [vmem:[%s303] sm:$0xff]
                %306 = vst [vmem:[%s304] sm:$0xff] %v305
                %v307 = vld [vmem:[%s303 + $0x18] sm:$0xff]
                %308 = vst [vmem:[%s304 + $0x8] sm:$0xff] %v307
              $region69: #{tpu_custom_call.1} parent=63 // loop_footer
                %s302 = sadd.s32 1, %s298
              $region70: #{tpu_custom_call.1} parent=63 // loop_footer_branch
                %297 = sbr.rel target = $region66
              $region71: #{tpu_custom_call.1} parent=63 // loop_exit
                _
            $region64: #{tpu_custom_call.1} parent=55 // pred_fallthru
              _
          $region56: #{tpu_custom_call.1} parent=51 // pred_fallthru
            _
          %325 = vnop
        $region52: #{tpu_custom_call.1} parent=47 // pred_fallthru
          _
      $region48: #{tpu_custom_call.1} parent=5 // pred_fallthru
        _
      %p326 = scmp.le.s32.totalorder 1, %s18
      %p327 = scmp.lt.s32.totalorder %s18, 4
      %p328 = pnand %p326, %p327
      %p329 = pneg %p328
      // Predicated region
      $region87: #{tpu_custom_call.1} parent=5 // pred_check
        _
      $region88: #{tpu_custom_call.1} parent=5 // pred_check_branch
        %331 = sbr.rel (%p328) target = $region90
      $region89: #{tpu_custom_call.1} parent=5 // pred_region
        %s332 = ssub.s32 %s18, 1
        %s333 = sand.u32 %s31, 1
        %s334 = sand.u32 %s31, 1
        %s335 = smul.addr %s334, 16
        %s336 = scalar_lea.vmem [#allocation2], %s335
        // Predicated region
        $region91: #{tpu_custom_call.1} parent=89 // pred_check
          %p337 = pneg %p44
        $region92: #{tpu_custom_call.1} parent=89 // pred_check_branch
          %339 = sbr.rel (%p337) target = $region94
        $region93: #{tpu_custom_call.1} parent=89 // pred_region
          _
        $region94: #{tpu_custom_call.1} parent=89 // pred_fallthru
          _
        %s340 = sand.u32 %s31, 1
        %s341 = sand.u32 %s31, 1
        %s342 = smul.addr %s341, 16
        %s343 = scalar_lea.vmem [#allocation2], %s342
        %p344 = pneg %p44
        %p345 = pneg %p41
        %p346 = pneg %p65
        %p347 = pneg %p62
        %p348 = pneg %p86
        %p349 = pneg %p83
        %p350 = pneg %p107
        %p351 = pneg %p104
        %p352 = pneg %p128
        %p353 = pneg %p125
        %p354 = pneg %p149
        %p355 = pneg %p146
        %p356 = pneg %p170
        %p357 = pneg %p167
        %p358 = pneg %p191
        %p359 = pneg %p188
        %p360 = pneg %p212
        %p361 = pneg %p209
        %p362 = pneg %p238
        %p363 = pneg %p235
        %s364 = sand.u32 %s225, 1
        %s365 = scalar_lea.sflag [#allocation4], %s364
        %s366 = sand.u32 %s225, 1
        %s367 = smul.addr %s366, 16
        %s368 = scalar_lea.vmem [#allocation3], %s367
        %v369 = vld [vmem:[%s336] sm:$0xff]
        %v370 = vld [vmem:[%s336 + $0x8] sm:$0xff]
        %v371 = vld [vmem:[%s1] sm:$0x1f]
        %v372 = vld [vmem:[%s2] sm:$0x1f]
        %374 = vset.pattern.permute.xlu0 0
        %375 = vperm.xlu0 %374, %v372
        %v376 = vpop.permute.xlu0 %375
        %vm378 = vcmask 130048
        %v380 = vsel %vm378, %v371, 0
        %382 = vmatprep.subr.mxu0 0.0
        %383 = vmatpush1.msra.mxu0 %v369
        %384 = vmatprep.subr.mxu0 0.0
        %385 = vmatpush1.msra.mxu0 %v370
        %386 = vmatprep.subr.mxu0 0.0
        %387 = vmatpush1.msra.mxu0 0.0
        %388 = vmatprep.subr.mxu0 0.0
        %389 = vmatpush1.msra.mxu0 0.0
        %390 = vmatprep.subr.mxu0 0.0
        %391 = vmatpush1.msra.mxu0 0.0
        %392 = vmatprep.subr.mxu0 0.0
        %393 = vmatpush1.msra.mxu0 0.0
        %394 = vmatprep.subr.mxu0 0.0
        %395 = vmatpush1.msra.mxu0 0.0
        %396 = vmatprep.subr.mxu0 0.0
        %397 = vmatpush1.msra.mxu0 0.0
        %398 = vmatprep.subr.mxu0 0.0
        %399 = vmatpush1.msra.mxu0 0.0
        %400 = vmatprep.subr.mxu0 0.0
        %401 = vmatpush1.msra.mxu0 0.0
        %402 = vmatprep.subr.mxu0 0.0
        %403 = vmatpush1.msra.mxu0 0.0
        %404 = vmatprep.subr.mxu0 0.0
        %405 = vmatpush1.msra.mxu0 0.0
        %406 = vmatprep.subr.mxu0 0.0
        %407 = vmatpush1.msra.mxu0 0.0
        %408 = vmatprep.subr.mxu0 0.0
        %409 = vmatpush1.msra.mxu0 0.0
        %410 = vmatprep.subr.mxu0 0.0
        %411 = vmatpush1.msra.mxu0 0.0
        %412 = vmatprep.subr.mxu0 0.0
        %413 = vmatpush1.msra.mxu0 0.0
        %414 = vmatprep.subr.mxu0 0.0
        %415 = vmatpush1.msra.mxu0 0.0
        %416 = vmatprep.subr.mxu0 0.0
        %417 = vmatpush1.msra.mxu0 0.0
        %418 = vmatprep.subr.mxu0 0.0
        %419 = vmatpush1.msra.mxu0 0.0
        %420 = vmatprep.subr.mxu0 0.0
        %421 = vmatpush1.msra.mxu0 0.0
        %422 = vmatprep.subr.mxu0 0.0
        %423 = vmatpush1.msra.mxu0 0.0
        %424 = vmatprep.subr.mxu0 0.0
        %425 = vmatpush1.msra.mxu0 0.0
        %426 = vmatprep.subr.mxu0 0.0
        %427 = vmatpush1.msra.mxu0 0.0
        %428 = vmatprep.subr.mxu0 0.0
        %429 = vmatpush1.msra.mxu0 0.0
        %430 = vmatprep.subr.mxu0 0.0
        %431 = vmatpush1.msra.mxu0 0.0
        %432 = vmatprep.subr.mxu0 0.0
        %433 = vmatpush1.msra.mxu0 0.0
        %434 = vmatprep.subr.mxu0 0.0
        %435 = vmatpush1.msra.mxu0 0.0
        %436 = vmatprep.subr.mxu0 0.0
        %437 = vmatpush1.msra.mxu0 0.0
        %438 = vmatprep.subr.mxu0 0.0
        %439 = vmatpush1.msra.mxu0 0.0
        %440 = vmatprep.subr.mxu0 0.0
        %441 = vmatpush1.msra.mxu0 0.0
        %442 = vmatprep.subr.mxu0 0.0
        %443 = vmatpush1.msra.mxu0 0.0
        %444 = vmatprep.subr.mxu0 0.0
        %445 = vmatpush1.msra.mxu0 0.0
        %446 = vmatprep.mubr.f32.mxu0 0.0
        %447 = vmatmul.mubr.f32.gmra.mrb[0].mxu0 %v380
        %v448 = vpop.f32.mrb[0].mxu0
        %v449 = vadd.f32 %v376, %v448
        %v450 = vpop.f32.mrb[0].mxu0
        %451 = vdwg.mxu0
        %v452 = vmax.f32 %v449, 0.0
        %v453 = vld [vmem:[%s3] sm:$0x3]
        %v454 = vld [vmem:[%s4] sm:$0x3]
        %456 = vset.pattern.permute.xlu0 0
        %457 = vperm.xlu0 %456, %v454
        %v458 = vpop.permute.xlu0 %457
        %vm460 = vcmask 39936
        %v462 = vsel %vm460, %v453, 0
        %vm464 = vcmask 1044480
        %v466 = vsel %vm464, %v452, 0
        %468 = vmatprep.subr.mxu0 0.0
        %469 = vmatpush1.msra.mxu0 %v466
        %470 = vmatprep.subr.mxu0 0.0
        %471 = vmatpush1.msra.mxu0 0.0
        %472 = vmatprep.subr.mxu0 0.0
        %473 = vmatpush1.msra.mxu0 0.0
        %474 = vmatprep.subr.mxu0 0.0
        %475 = vmatpush1.msra.mxu0 0.0
        %476 = vmatprep.subr.mxu0 0.0
        %477 = vmatpush1.msra.mxu0 0.0
        %478 = vmatprep.subr.mxu0 0.0
        %479 = vmatpush1.msra.mxu0 0.0
        %480 = vmatprep.subr.mxu0 0.0
        %481 = vmatpush1.msra.mxu0 0.0
        %482 = vmatprep.subr.mxu0 0.0
        %483 = vmatpush1.msra.mxu0 0.0
        %484 = vmatprep.subr.mxu0 0.0
        %485 = vmatpush1.msra.mxu0 0.0
        %486 = vmatprep.subr.mxu0 0.0
        %487 = vmatpush1.msra.mxu0 0.0
        %488 = vmatprep.subr.mxu0 0.0
        %489 = vmatpush1.msra.mxu0 0.0
        %490 = vmatprep.subr.mxu0 0.0
        %491 = vmatpush1.msra.mxu0 0.0
        %492 = vmatprep.subr.mxu0 0.0
        %493 = vmatpush1.msra.mxu0 0.0
        %494 = vmatprep.subr.mxu0 0.0
        %495 = vmatpush1.msra.mxu0 0.0
        %496 = vmatprep.subr.mxu0 0.0
        %497 = vmatpush1.msra.mxu0 0.0
        %498 = vmatprep.subr.mxu0 0.0
        %499 = vmatpush1.msra.mxu0 0.0
        %500 = vmatprep.subr.mxu0 0.0
        %501 = vmatpush1.msra.mxu0 0.0
        %502 = vmatprep.subr.mxu0 0.0
        %503 = vmatpush1.msra.mxu0 0.0
        %504 = vmatprep.subr.mxu0 0.0
        %505 = vmatpush1.msra.mxu0 0.0
        %506 = vmatprep.subr.mxu0 0.0
        %507 = vmatpush1.msra.mxu0 0.0
        %508 = vmatprep.subr.mxu0 0.0
        %509 = vmatpush1.msra.mxu0 0.0
        %510 = vmatprep.subr.mxu0 0.0
        %511 = vmatpush1.msra.mxu0 0.0
        %512 = vmatprep.subr.mxu0 0.0
        %513 = vmatpush1.msra.mxu0 0.0
        %514 = vmatprep.subr.mxu0 0.0
        %515 = vmatpush1.msra.mxu0 0.0
        %516 = vmatprep.subr.mxu0 0.0
        %517 = vmatpush1.msra.mxu0 0.0
        %518 = vmatprep.subr.mxu0 0.0
        %519 = vmatpush1.msra.mxu0 0.0
        %520 = vmatprep.subr.mxu0 0.0
        %521 = vmatpush1.msra.mxu0 0.0
        %522 = vmatprep.subr.mxu0 0.0
        %523 = vmatpush1.msra.mxu0 0.0
        %524 = vmatprep.subr.mxu0 0.0
        %525 = vmatpush1.msra.mxu0 0.0
        %526 = vmatprep.subr.mxu0 0.0
        %527 = vmatpush1.msra.mxu0 0.0
        %528 = vmatprep.subr.mxu0 0.0
        %529 = vmatpush1.msra.mxu0 0.0
        %530 = vmatprep.subr.mxu0 0.0
        %531 = vmatpush1.msra.mxu0 0.0
        %532 = vmatprep.mubr.f32.mxu0 0.0
        %533 = vmatmul.mubr.f32.gmra.mrb[0].mxu0 %v462
        %v534 = vpop.f32.mrb[0].mxu0
        %v535 = vadd.f32 %v458, %v534
        %v536 = vpop.f32.mrb[0].mxu0
        %537 = vdwg.mxu0
        %v538 = vmax.f32 %v535, 0.0
        %v539 = vld [vmem:[%s5] sm:$0x1f]
        %v540 = vld [vmem:[%s6] sm:$0x1f]
        %542 = vset.pattern.permute.xlu0 0
        %543 = vperm.xlu0 %542, %v540
        %v544 = vpop.permute.xlu0 %543
        %vm546 = vcmask 15360
        %v548 = vsel %vm546, %v539, 0
        %vm550 = vcmask 1041408
        %v552 = vsel %vm550, %v538, 0
        %554 = vmatprep.subr.mxu0 0.0
        %555 = vmatpush1.msra.mxu0 %v552
        %556 = vmatprep.subr.mxu0 0.0
        %557 = vmatpush1.msra.mxu0 0.0
        %558 = vmatprep.subr.mxu0 0.0
        %559 = vmatpush1.msra.mxu0 0.0
        %560 = vmatprep.subr.mxu0 0.0
        %561 = vmatpush1.msra.mxu0 0.0
        %562 = vmatprep.subr.mxu0 0.0
        %563 = vmatpush1.msra.mxu0 0.0
        %564 = vmatprep.subr.mxu0 0.0
        %565 = vmatpush1.msra.mxu0 0.0
        %566 = vmatprep.subr.mxu0 0.0
        %567 = vmatpush1.msra.mxu0 0.0
        %568 = vmatprep.subr.mxu0 0.0
        %569 = vmatpush1.msra.mxu0 0.0
        %570 = vmatprep.subr.mxu0 0.0
        %571 = vmatpush1.msra.mxu0 0.0
        %572 = vmatprep.subr.mxu0 0.0
        %573 = vmatpush1.msra.mxu0 0.0
        %574 = vmatprep.subr.mxu0 0.0
        %575 = vmatpush1.msra.mxu0 0.0
        %576 = vmatprep.subr.mxu0 0.0
        %577 = vmatpush1.msra.mxu0 0.0
        %578 = vmatprep.subr.mxu0 0.0
        %579 = vmatpush1.msra.mxu0 0.0
        %580 = vmatprep.subr.mxu0 0.0
        %581 = vmatpush1.msra.mxu0 0.0
        %582 = vmatprep.subr.mxu0 0.0
        %583 = vmatpush1.msra.mxu0 0.0
        %584 = vmatprep.subr.mxu0 0.0
        %585 = vmatpush1.msra.mxu0 0.0
        %586 = vmatprep.subr.mxu0 0.0
        %587 = vmatpush1.msra.mxu0 0.0
        %588 = vmatprep.subr.mxu0 0.0
        %589 = vmatpush1.msra.mxu0 0.0
        %590 = vmatprep.subr.mxu0 0.0
        %591 = vmatpush1.msra.mxu0 0.0
        %592 = vmatprep.subr.mxu0 0.0
        %593 = vmatpush1.msra.mxu0 0.0
        %594 = vmatprep.subr.mxu0 0.0
        %595 = vmatpush1.msra.mxu0 0.0
        %596 = vmatprep.subr.mxu0 0.0
        %597 = vmatpush1.msra.mxu0 0.0
        %598 = vmatprep.subr.mxu0 0.0
        %599 = vmatpush1.msra.mxu0 0.0
        %600 = vmatprep.subr.mxu0 0.0
        %601 = vmatpush1.msra.mxu0 0.0
        %602 = vmatprep.subr.mxu0 0.0
        %603 = vmatpush1.msra.mxu0 0.0
        %604 = vmatprep.subr.mxu0 0.0
        %605 = vmatpush1.msra.mxu0 0.0
        %606 = vmatprep.subr.mxu0 0.0
        %607 = vmatpush1.msra.mxu0 0.0
        %608 = vmatprep.subr.mxu0 0.0
        %609 = vmatpush1.msra.mxu0 0.0
        %610 = vmatprep.subr.mxu0 0.0
        %611 = vmatpush1.msra.mxu0 0.0
        %612 = vmatprep.subr.mxu0 0.0
        %613 = vmatpush1.msra.mxu0 0.0
        %614 = vmatprep.subr.mxu0 0.0
        %615 = vmatpush1.msra.mxu0 0.0
        %616 = vmatprep.subr.mxu0 0.0
        %617 = vmatpush1.msra.mxu0 0.0
        %618 = vmatprep.mubr.f32.mxu0 0.0
        %619 = vmatmul.mubr.f32.gmra.mrb[0].mxu0 %v548
        %v620 = vpop.f32.mrb[0].mxu0
        %v621 = vadd.f32 %v544, %v620
        %v622 = vpop.f32.mrb[0].mxu0
        %623 = vdwg.mxu0
        %v624 = vmax.f32 %v621, 0.0
        %v625 = vld [vmem:[%s7] sm:$0xff]
        %v626 = vld [vmem:[%s7 + $0x8] sm:$0xff]
        %v627 = vld [vmem:[%s8] sm:$0xff]
        %v628 = vld [vmem:[%s8 + $0x8] sm:$0xff]
        %630 = vset.pattern.permute.xlu0 0
        %631 = vperm.xlu0 %630, %v627
        %v632 = vpop.permute.xlu0 %631
        %635 = vset.pattern.permute.xlu0 0
        %636 = vperm.xlu0 %635, %v628
        %v637 = vpop.permute.xlu0 %636
        %v640 = vsel %vm460, %v625, 0
        %v643 = vsel %vm460, %v626, 0
        %v646 = vsel %vm464, %v624, 0
        %648 = vmatprep.subr.mxu0 0.0
        %649 = vmatpush1.msra.mxu0 %v646
        %650 = vmatprep.subr.mxu0 0.0
        %651 = vmatpush1.msra.mxu0 0.0
        %652 = vmatprep.subr.mxu0 0.0
        %653 = vmatpush1.msra.mxu0 0.0
        %654 = vmatprep.subr.mxu0 0.0
        %655 = vmatpush1.msra.mxu0 0.0
        %656 = vmatprep.subr.mxu0 0.0
        %657 = vmatpush1.msra.mxu0 0.0
        %658 = vmatprep.subr.mxu0 0.0
        %659 = vmatpush1.msra.mxu0 0.0
        %660 = vmatprep.subr.mxu0 0.0
        %661 = vmatpush1.msra.mxu0 0.0
        %662 = vmatprep.subr.mxu0 0.0
        %663 = vmatpush1.msra.mxu0 0.0
        %664 = vmatprep.subr.mxu0 0.0
        %665 = vmatpush1.msra.mxu0 0.0
        %666 = vmatprep.subr.mxu0 0.0
        %667 = vmatpush1.msra.mxu0 0.0
        %668 = vmatprep.subr.mxu0 0.0
        %669 = vmatpush1.msra.mxu0 0.0
        %670 = vmatprep.subr.mxu0 0.0
        %671 = vmatpush1.msra.mxu0 0.0
        %672 = vmatprep.subr.mxu0 0.0
        %673 = vmatpush1.msra.mxu0 0.0
        %674 = vmatprep.subr.mxu0 0.0
        %675 = vmatpush1.msra.mxu0 0.0
        %676 = vmatprep.subr.mxu0 0.0
        %677 = vmatpush1.msra.mxu0 0.0
        %678 = vmatprep.subr.mxu0 0.0
        %679 = vmatpush1.msra.mxu0 0.0
        %680 = vmatprep.subr.mxu0 0.0
        %681 = vmatpush1.msra.mxu0 0.0
        %682 = vmatprep.subr.mxu0 0.0
        %683 = vmatpush1.msra.mxu0 0.0
        %684 = vmatprep.subr.mxu0 0.0
        %685 = vmatpush1.msra.mxu0 0.0
        %686 = vmatprep.subr.mxu0 0.0
        %687 = vmatpush1.msra.mxu0 0.0
        %688 = vmatprep.subr.mxu0 0.0
        %689 = vmatpush1.msra.mxu0 0.0
        %690 = vmatprep.subr.mxu0 0.0
        %691 = vmatpush1.msra.mxu0 0.0
        %692 = vmatprep.subr.mxu0 0.0
        %693 = vmatpush1.msra.mxu0 0.0
        %694 = vmatprep.subr.mxu0 0.0
        %695 = vmatpush1.msra.mxu0 0.0
        %696 = vmatprep.subr.mxu0 0.0
        %697 = vmatpush1.msra.mxu0 0.0
        %698 = vmatprep.subr.mxu0 0.0
        %699 = vmatpush1.msra.mxu0 0.0
        %700 = vmatprep.subr.mxu0 0.0
        %701 = vmatpush1.msra.mxu0 0.0
        %702 = vmatprep.subr.mxu0 0.0
        %703 = vmatpush1.msra.mxu0 0.0
        %704 = vmatprep.subr.mxu0 0.0
        %705 = vmatpush1.msra.mxu0 0.0
        %706 = vmatprep.subr.mxu0 0.0
        %707 = vmatpush1.msra.mxu0 0.0
        %708 = vmatprep.subr.mxu0 0.0
        %709 = vmatpush1.msra.mxu0 0.0
        %710 = vmatprep.subr.mxu0 0.0
        %711 = vmatpush1.msra.mxu0 0.0
        %712 = vmatprep.mubr.f32.mxu0 0.0
        %713 = vmatmul.mubr.f32.gmra.mrb[0].mxu0 %v640
        %v714 = vpop.f32.mrb[0].mxu0
        %v715 = vadd.f32 %v632, %v714
        %v716 = vpop.f32.mrb[0].mxu0
        %717 = vmatprep.mubr.f32.mxu0 0.0
        %718 = vmatmul.mubr.f32.gmra.mrb[0].mxu0 %v643
        %v719 = vpop.f32.mrb[0].mxu0
        %v720 = vadd.f32 %v637, %v719
        %v721 = vpop.f32.mrb[0].mxu0
        %722 = vdwg.mxu0
        %v723 = vmax.f32 %v715, 0.0
        %v724 = vmax.f32 %v720, 0.0
        %725 = vst [vmem:[%s368] sm:$0xff] %v723
        %726 = vst [vmem:[%s368 + $0x8] sm:$0xff] %v724
        %s727 = sand.u32 %s225, 1
        %s728 = scalar_lea.sflag [#allocation4], %s727
        %s729 = sand.u32 %s225, 1
        %s730 = smul.addr %s729, 16
        %s731 = scalar_lea.vmem [#allocation3], %s730
        // Predicated region
        $region95: #{tpu_custom_call.1} parent=89 // pred_check
          %p732 = pneg %p235
        $region96: #{tpu_custom_call.1} parent=89 // pred_check_branch
          %734 = sbr.rel (%p732) target = $region98
        $region97: #{tpu_custom_call.1} parent=89 // pred_region
          %s736 = ssub.s32 256, 256
          %737 = vsyncadd %s728, %s736
          %s738 = smul.addr %s23, 128
          %s739 = scalar_lea.hbm %s9, %s738
          %s740 = sshll.u32 %s731, 4
          %s741 = int_to_ptr.vmem [resolvable:$true] %s740
          %746 = dma.vmem_to_hbm [thread:$0]  %s741, 256, %s739, %s728, 128, 384, 8
        $region98: #{tpu_custom_call.1} parent=89 // pred_fallthru
          _
      $region90: #{tpu_custom_call.1} parent=5 // pred_fallthru
        _
      %p747 = scmp.le.s32.totalorder 2, %s18
      // Predicated region
      $region99: #{tpu_custom_call.1} parent=5 // pred_check
        %p748 = pneg %p747
      $region100: #{tpu_custom_call.1} parent=5 // pred_check_branch
        %750 = sbr.rel (%p748) target = $region102
      $region101: #{tpu_custom_call.1} parent=5 // pred_region
        %s751 = ssub.s32 %s18, 2
        // Predicated region
        $region103: #{tpu_custom_call.1} parent=101 // pred_check
          %p752 = pneg %p241
        $region104: #{tpu_custom_call.1} parent=101 // pred_check_branch
          %754 = sbr.rel (%p752) target = $region106
        $region105: #{tpu_custom_call.1} parent=101 // pred_region
          %s755 = sand.u32 %s226, 1
          %s756 = scalar_lea.sflag [#allocation4], %s755
          %s757 = sand.u32 %s226, 1
          %s758 = smul.addr %s757, 16
          %s759 = scalar_lea.vmem [#allocation3], %s758
          %760 = dma.done %s756, 256
        $region106: #{tpu_custom_call.1} parent=101 // pred_fallthru
          _
      $region102: #{tpu_custom_call.1} parent=5 // pred_fallthru
        _
    $region6: #{tpu_custom_call.1} parent=1 // loop_footer
      %s22 = sadd.s32 1, %s18
    $region7: #{tpu_custom_call.1} parent=1 // loop_footer_branch
      %17 = sbr.rel target = $region3
    $region8: #{tpu_custom_call.1} parent=1 // loop_exit
      _
    %761 = vsyncpa [#allocation4], 1
    %s762 = scalar_lea.sflag [#allocation4], 1
    %763 = vsyncpa %s762, 1

</llo_original>
